<compile_context>
chip_gen: v6e
topology: v6e:2x2x1
jax: 0.10.0
libtpu: 0.0.40
codegen_flags: <defaults>
</compile_context>

<pallas_src>
import functools

import jax
import jax.numpy as jnp
from jax.experimental import pallas as pl
from jax.experimental.pallas import tpu as pltpu

_DEFAULT_BLOCK_B = 128 * 1024  # batch columns per grid step (multiple of 128)


def policy_net_kernel(x_ref, w1_ref, b1_ref, w2_ref, b2_ref, out_ref):
    x = x_ref[...]                                  # [4, tb] f32, batch on lanes

    # Layer 1 on the MXU (the MXU slot is otherwise idle; VPU is left for the cheap
    # elementwise work so the kernel stays HBM-bound).
    h = jnp.dot(w1_ref[...], x,
                preferred_element_type=jnp.float32,
                precision=jax.lax.Precision.HIGHEST)      # [24, tb]
    h = jnp.maximum(h + b1_ref[...], 0.0)                 # bias + ReLU on VPU

    # Layer 2 on the MXU.
    logits = jnp.dot(w2_ref[...], h,
                     preferred_element_type=jnp.float32,
                     precision=jax.lax.Precision.HIGHEST)  # [3, tb]
    logits = logits + b2_ref[...]

    # Softmax over the 3 classes: sublane reductions go to the (idle) XLU, exp to the
    # EUP, and the normalization uses an exact divide so rows sum to 1 to f32 precision.
    m = jnp.max(logits, axis=0, keepdims=True)             # [1, tb]
    e = jnp.exp(logits - m)                                 # [3, tb]
    denom = jnp.sum(e, axis=0, keepdims=True)               # [1, tb]
    out_ref[...] = (e / denom).astype(out_ref.dtype)


def _round_up(n, m):
    return (n + m - 1) // m * m


@functools.partial(jax.jit, static_argnames=("block_b",))
def policy_network_forward_lane_major(x_t, w1, b1, w2, b2, block_b=_DEFAULT_BLOCK_B):
    """Copy-free path: x_t is [4, B] (batch on lanes), returns probs_t [3, B].

    Weights use PyTorch's [out, in] layout: w1 [24,4], b1 [24,1], w2 [3,24], b2 [3,1].
    """
    B = x_t.shape[1]
    # Lane-dense batch tile (multiple of 128); big tiles amortize per-step overhead.
    tb = min(block_b, _round_up(B, 128))
    Bp = _round_up(B, tb)
    num_tiles = Bp // tb

    x_t = x_t.astype(jnp.float32)
    if Bp != B:
        x_t = jnp.pad(x_t, ((0, 0), (0, Bp - B)))  # zero columns; dropped after the call

    # x / out tiles (4 and 3 sublanes pad to 8) double-buffered: ~128*tb bytes of VMEM.
    vmem_limit = max(32 << 20, 128 * tb + (4 << 20))

    # Deeper prefetch on the streaming operand only when the grid is long enough.
    if num_tiles >= 4:
        x_spec = pl.BlockSpec((4, tb), lambda i: (0, i), pipeline_mode=pl.Buffered(3))
    else:
        x_spec = pl.BlockSpec((4, tb), lambda i: (0, i))

    out_t = pl.pallas_call(
        policy_net_kernel,
        out_shape=jax.ShapeDtypeStruct((3, Bp), jnp.float32),
        grid=(num_tiles,),
        in_specs=[
            x_spec,                                        # x tiles stream through VMEM
            pl.BlockSpec((24, 4), lambda i: (0, 0)),       # weights stay resident
            pl.BlockSpec((24, 1), lambda i: (0, 0)),
            pl.BlockSpec((3, 24), lambda i: (0, 0)),
            pl.BlockSpec((3, 1), lambda i: (0, 0)),
        ],
        out_specs=pl.BlockSpec((3, tb), lambda i: (0, i)),
        compiler_params=pltpu.CompilerParams(
            # Independent batch tiles -> megacore sharding on v7x (no-op on v5e/v6e).
            dimension_semantics=("parallel",),
            vmem_limit_bytes=int(vmem_limit),
            # Let XLA fuse the producing transpose/pad of x into the operand DMA.
            allow_input_fusion=[True, False, False, False, False],
        ),
        cost_estimate=pl.CostEstimate(
            flops=2 * Bp * (4 * 24 + 24 * 3),
            transcendentals=4 * Bp,
            bytes_accessed=4 * (Bp * (4 + 3) + 24 * 4 + 24 + 3 * 24 + 3),
        ),
    )(x_t, w1, b1, w2, b2)

    return out_t[:, :B] if Bp != B else out_t


@functools.partial(jax.jit, static_argnames=("block_b",))
def policy_network_forward(x, w1, b1, w2, b2, block_b=_DEFAULT_BLOCK_B):
    """PyTorch-layout wrapper: x [B, 4] float32 -> probs [B, 3] float32.

    The layout transposes are left to XLA (allow_input_fusion lets the input one fold
    into the kernel's operand DMA).  Consumers that can work in the lane-major layout
    should call policy_network_forward_lane_major directly and skip both transposes.
    """
    probs_t = policy_network_forward_lane_major(x.T, w1, b1, w2, b2, block_b=block_b)
    return probs_t.T


def init_params(key):
    """Mirror nn.Linear's default U(-1/sqrt(fan_in), 1/sqrt(fan_in)), [out, in] layout."""
    k1, k2, k3, k4 = jax.random.split(key, 4)
    bound1 = 1.0 / jnp.sqrt(4.0)
    bound2 = 1.0 / jnp.sqrt(24.0)
    w1 = jax.random.uniform(k1, (24, 4), jnp.float32, -bound1, bound1)
    b1 = jax.random.uniform(k2, (24, 1), jnp.float32, -bound1, bound1)
    w2 = jax.random.uniform(k3, (3, 24), jnp.float32, -bound2, bound2)
    b2 = jax.random.uniform(k4, (3, 1), jnp.float32, -bound2, bound2)
    return w1, b1, w2, b2


def reference_forward(x, w1, b1, w2, b2):
    h = jnp.maximum(
        jnp.dot(x, w1.T, precision=jax.lax.Precision.HIGHEST) + b1[:, 0], 0.0)
    logits = jnp.dot(h, w2.T, precision=jax.lax.Precision.HIGHEST) + b2[:, 0]
    return jax.nn.softmax(logits, axis=-1)


if __name__ == "__main__":
    key = jax.random.PRNGKey(0)
    k_params, k_x = jax.random.split(key)

    w1, b1, w2, b2 = init_params(k_params)
    x = jax.random.normal(k_x, (8, 4), jnp.float32)  # batch=8, CartPole-style 4-dim state

    probs = policy_network_forward(x, w1, b1, w2, b2)
    probs = jax.block_until_ready(probs)

    ref = reference_forward(x, w1, b1, w2, b2)
    assert probs.shape == (8, 3)
    # Exact normalization in-kernel -> rows sum to 1 within f32 rounding.
    assert jnp.allclose(jnp.sum(probs, axis=-1), 1.0, atol=1e-5)
    assert jnp.allclose(probs, ref, atol=5e-4)

    print("KERNEL_OK")
</pallas_src>

<mosaic_0001>
module attributes {stable_mosaic.version = 11 : i64} {
  func.func @policy_net_kernel(%arg0: i32, %arg1: memref<4x128xf32, #tpu.memory_space<vmem>>, %arg2: memref<24x4xf32, #tpu.memory_space<vmem>>, %arg3: memref<24x1xf32, #tpu.memory_space<vmem>>, %arg4: memref<3x24xf32, #tpu.memory_space<vmem>>, %arg5: memref<3x1xf32, #tpu.memory_space<vmem>>, %arg6: memref<3x128xf32, #tpu.memory_space<vmem>>) attributes {dimension_semantics = [#tpu.dimension_semantics<parallel>], iteration_bounds = array<i64: 1>, scalar_prefetch = 0 : i64, scratch_operands = 0 : i64, tpu.core_type = #tpu.core_type<tc>, window_params = [{transform_indices = @transform_0, window_bounds = array<i64: 4, 128>}, {pipeline_mode = #tpu.pipeline_mode<synchronous>, transform_indices = @transform_1, window_bounds = array<i64: 24, 4>}, {pipeline_mode = #tpu.pipeline_mode<synchronous>, transform_indices = @transform_2, window_bounds = array<i64: 24, 1>}, {pipeline_mode = #tpu.pipeline_mode<synchronous>, transform_indices = @transform_3, window_bounds = array<i64: 3, 24>}, {pipeline_mode = #tpu.pipeline_mode<synchronous>, transform_indices = @transform_4, window_bounds = array<i64: 3, 1>}, {transform_indices = @transform_5, window_bounds = array<i64: 3, 128>}]} {
    %c0 = arith.constant 0 : index
    %c0_0 = arith.constant 0 : index
    %0 = vector.load %arg1[%c0, %c0_0] : memref<4x128xf32, #tpu.memory_space<vmem>>, vector<4x128xf32>
    %c0_1 = arith.constant 0 : index
    %c0_2 = arith.constant 0 : index
    %1 = vector.load %arg2[%c0_1, %c0_2] : memref<24x4xf32, #tpu.memory_space<vmem>>, vector<24x4xf32>
    %cst = arith.constant dense<0.000000e+00> : vector<24x128xf32>
    %2 = tpu.matmul %1, %0, %cst {dimension_numbers = #tpu.dot_dimension_numbers<[1], [0], [0], [1], [0, 0, 1, 1], [], []>, precision = #tpu.contract_precision<fp32>} : vector<24x4xf32>, vector<4x128xf32>, vector<24x128xf32> -> vector<24x128xf32>
    %c0_3 = arith.constant 0 : index
    %c0_4 = arith.constant 0 : index
    %3 = vector.load %arg3[%c0_3, %c0_4] : memref<24x1xf32, #tpu.memory_space<vmem>>, vector<24x1xf32>
    %4 = vector.broadcast %3 : vector<24x1xf32> to vector<24x128xf32>
    %5 = arith.addf %2, %4 : vector<24x128xf32>
    %cst_5 = arith.constant 0.000000e+00 : f32
    %6 = vector.broadcast %cst_5 : f32 to vector<24x128xf32>
    %7 = arith.maximumf %5, %6 : vector<24x128xf32>
    %c0_6 = arith.constant 0 : index
    %c0_7 = arith.constant 0 : index
    %8 = vector.load %arg4[%c0_6, %c0_7] : memref<3x24xf32, #tpu.memory_space<vmem>>, vector<3x24xf32>
    %cst_8 = arith.constant dense<0.000000e+00> : vector<3x128xf32>
    %9 = tpu.matmul %8, %7, %cst_8 {dimension_numbers = #tpu.dot_dimension_numbers<[1], [0], [0], [1], [0, 0, 1, 1], [], []>, precision = #tpu.contract_precision<fp32>} : vector<3x24xf32>, vector<24x128xf32>, vector<3x128xf32> -> vector<3x128xf32>
    %c0_9 = arith.constant 0 : index
    %c0_10 = arith.constant 0 : index
    %10 = vector.load %arg5[%c0_9, %c0_10] : memref<3x1xf32, #tpu.memory_space<vmem>>, vector<3x1xf32>
    %11 = vector.broadcast %10 : vector<3x1xf32> to vector<3x128xf32>
    %12 = arith.addf %9, %11 : vector<3x128xf32>
    %cst_11 = arith.constant dense<0xFF800000> : vector<128xf32>
    %13 = vector.multi_reduction <maximumf>, %12, %cst_11 [0] : vector<3x128xf32> to vector<128xf32>
    %14 = vector.shape_cast %13 : vector<128xf32> to vector<1x128xf32>
    %15 = vector.broadcast %14 : vector<1x128xf32> to vector<3x128xf32>
    %16 = arith.subf %12, %15 : vector<3x128xf32>
    %17 = math.exp %16 : vector<3x128xf32>
    %cst_12 = arith.constant dense<0.000000e+00> : vector<128xf32>
    %18 = vector.multi_reduction <add>, %17, %cst_12 [0] : vector<3x128xf32> to vector<128xf32>
    %19 = vector.shape_cast %18 : vector<128xf32> to vector<1x128xf32>
    %20 = vector.broadcast %19 : vector<1x128xf32> to vector<3x128xf32>
    %21 = arith.divf %17, %20 : vector<3x128xf32>
    %c0_13 = arith.constant 0 : index
    %c0_14 = arith.constant 0 : index
    %22 = vector.load %arg6[%c0_13, %c0_14] : memref<3x128xf32, #tpu.memory_space<vmem>>, vector<3x128xf32>
    tpu.vector_store %arg6[%c0_13, %c0_14], %21 {strides = array<i32>} : memref<3x128xf32, #tpu.memory_space<vmem>>, vector<3x128xf32>,
    return
  }
  func.func @transform_0(%arg0: i32) -> (i32, i32) {
    %c0_i32 = arith.constant 0 : i32
    %c0_i32_0 = arith.constant 0 : i32
    return %c0_i32, %arg0 : i32, i32
  }
  func.func @transform_1(%arg0: i32) -> (i32, i32) {
    %c0_i32 = arith.constant 0 : i32
    %c0_i32_0 = arith.constant 0 : i32
    %c0_i32_1 = arith.constant 0 : i32
    return %c0_i32, %c0_i32_0 : i32, i32
  }
  func.func @transform_2(%arg0: i32) -> (i32, i32) {
    %c0_i32 = arith.constant 0 : i32
    %c0_i32_0 = arith.constant 0 : i32
    %c0_i32_1 = arith.constant 0 : i32
    return %c0_i32, %c0_i32_0 : i32, i32
  }
  func.func @transform_3(%arg0: i32) -> (i32, i32) {
    %c0_i32 = arith.constant 0 : i32
    %c0_i32_0 = arith.constant 0 : i32
    %c0_i32_1 = arith.constant 0 : i32
    return %c0_i32, %c0_i32_0 : i32, i32
  }
  func.func @transform_4(%arg0: i32) -> (i32, i32) {
    %c0_i32 = arith.constant 0 : i32
    %c0_i32_0 = arith.constant 0 : i32
    %c0_i32_1 = arith.constant 0 : i32
    return %c0_i32, %c0_i32_0 : i32, i32
  }
  func.func @transform_5(%arg0: i32) -> (i32, i32) {
    %c0_i32 = arith.constant 0 : i32
    %c0_i32_0 = arith.constant 0 : i32
    return %c0_i32, %arg0 : i32, i32
  }
}

</mosaic_0001>

<llo_original>
// kernel: policy_network_forward_lane_major.2
$region0: #{policy_network_forward_lane_major.2}
  #allocation0 [shape = 'u32[]', space=smem, size = 0x4, offset = 0x4, fixed_abs, tag = 'smem constant byte address 0x4 - core index']
  #allocation1 [shape = 'u32[144,128]{1,0:T(1,128)}', space=vmem, size = 0x12000, scoped, tag = 'internal scratch']
  #allocation2 [shape = 'u32[2048]{0}', space=vmem, size = 0x2000, scoped, tag = 'scoped memory for policy_network_forward_lane_major.2']
  #allocation3 [shape = 'u32[2048]{0}', space=vmem, size = 0x2000, scoped, tag = 'scoped memory for policy_network_forward_lane_major.2']
  #allocation4 [shape = 'u32[2048]{0}', space=vmem, size = 0x2000, scoped, tag = 'scoped memory for policy_network_forward_lane_major.2']
  #allocation5 [shape = 'u32[2048]{0}', space=vmem, size = 0x2000, scoped, tag = 'scoped memory for policy_network_forward_lane_major.2']
  #allocation6 [shape = 'u32[2048]{0}', space=vmem, size = 0x2000, scoped, tag = 'scoped memory for policy_network_forward_lane_major.2']
  %s0 = inlined_call_operand.vmem [shape: f32[24,4], index: 0, kind: input, shape index: {}]
  %s1 = inlined_call_operand.vmem [shape: f32[24,1], index: 1, kind: input, shape index: {}]
  %s2 = inlined_call_operand.vmem [shape: f32[3,24], index: 2, kind: input, shape index: {}]
  %s3 = inlined_call_operand.vmem [shape: f32[3,1], index: 3, kind: input, shape index: {}]
  %s4 = inlined_call_operand.vmem [shape: f32[4,8], index: 4, kind: input, shape index: {}]
  %s5 = inlined_call_operand.<no memory space> [shape: f32[], index: 5, kind: input, shape index: {}]
  %s6 = inlined_call_operand.hbm [shape: f32[3,128], index: 6, kind: output, shape index: {}]
  %s7 = sld [smem:[#allocation0]]
  $region30: #{policy_network_forward_lane_major.2} parent=0
    _
  %s9 = ssub.s32 1, %s7
  %s10 = scalar_select 0, %s9, %s7
  %v11 = vstv %s5
  $region1: #{policy_network_forward_lane_major.2} parent=0
    #allocation7 [shape = 'u8[2048]{0}', space=vmem, size = 0x800, scoped, tag = 'output window, operand 0, single buffered']
    #allocation8 [shape = 's32[1]{0}', space=sflag, size = 0x4, scoped, tag = 'scoped memory for policy_network_forward_lane_major.2']
    #allocation9 [shape = 'u8[2048]{0}', space=vmem, size = 0x800, dematerialized = true, scoped, tag = 'FusionAdapter Buffer %fusion.1 = f32[4,128]{1,0:T(4,128)} fusion(%param_4.1, %param_5), kind=kLoop, calls=%fused_computation.1.clone, metadata={op_name="jit(policy_network_forward_lane_major)/jit(_pad)/pad" stack_frame_id=1}']
    %12 = vsyncpa [#allocation8], 0
    // Predicated region
    $region2: #{policy_network_forward_lane_major.2} parent=1 // pred_check
      _
    $region3: #{policy_network_forward_lane_major.2} parent=1 // pred_check_branch
      %14 = sbr.rel (0) target = $region5
    $region4: #{policy_network_forward_lane_major.2} parent=1 // pred_region
      _
    $region5: #{policy_network_forward_lane_major.2} parent=1 // pred_fallthru
      _
    // Predicated region
    $region6: #{policy_network_forward_lane_major.2} parent=1 // pred_check
      _
    $region7: #{policy_network_forward_lane_major.2} parent=1 // pred_check_branch
      %16 = sbr.rel (0) target = $region9
    $region8: #{policy_network_forward_lane_major.2} parent=1 // pred_region
      _
    $region9: #{policy_network_forward_lane_major.2} parent=1 // pred_fallthru
      _
    // Predicated region
    $region10: #{policy_network_forward_lane_major.2} parent=1 // pred_check
      _
    $region11: #{policy_network_forward_lane_major.2} parent=1 // pred_check_branch
      %18 = sbr.rel (0) target = $region13
    $region12: #{policy_network_forward_lane_major.2} parent=1 // pred_region
      _
    $region13: #{policy_network_forward_lane_major.2} parent=1 // pred_fallthru
      _
    // Predicated region
    $region14: #{policy_network_forward_lane_major.2} parent=1 // pred_check
      _
    $region15: #{policy_network_forward_lane_major.2} parent=1 // pred_check_branch
      %20 = sbr.rel (0) target = $region17
    $region16: #{policy_network_forward_lane_major.2} parent=1 // pred_region
      _
    $region17: #{policy_network_forward_lane_major.2} parent=1 // pred_fallthru
      _
    // Predicated region
    $region18: #{policy_network_forward_lane_major.2} parent=1 // pred_check
      _
    $region19: #{policy_network_forward_lane_major.2} parent=1 // pred_check_branch
      %22 = sbr.rel (0) target = $region21
    $region20: #{policy_network_forward_lane_major.2} parent=1 // pred_region
      _
    $region21: #{policy_network_forward_lane_major.2} parent=1 // pred_fallthru
      _
    %v23 = vld [vmem:[%s4] sm:$0xf]
    %v24 = vlaneseq
    %v25 = vshrl.u32 %v24, 7
    %vm27 = vcmp.lt.s32.totalorder %v25, 4
    %v28 = vsel %vm27, %v23, %v11
    %v29 = vlaneseq
    %v30 = vand.u32 %v29, 127
    %vm32 = vcmp.lt.s32.totalorder %v30, 8
    %v33 = vsel %vm32, %v28, %v11
    %s35 = ssub.s32 16, 1
    %36 = vst [vmem:[#allocation9] sm:%s35] %v33
    %v37 = vld [vmem:[#allocation9] sm:$0xf]
    %v38 = vld [vmem:[%s0] sm:$0xff]
    %v39 = vld [vmem:[%s0 + $0x8] sm:$0xff]
    %v40 = vld [vmem:[%s0 + $0x10] sm:$0xff]
    %v41 = vld [vmem:[%s1] sm:$0xff]
    %v42 = vld [vmem:[%s1 + $0x8] sm:$0xff]
    %v43 = vld [vmem:[%s1 + $0x10] sm:$0xff]
    %45 = vset.pattern.permute.xlu0 0
    %46 = vperm.xlu0 %45, %v41
    %v47 = vpop.permute.xlu0 %46
    %50 = vset.pattern.permute.xlu0 0
    %51 = vperm.xlu0 %50, %v42
    %v52 = vpop.permute.xlu0 %51
    %55 = vset.pattern.permute.xlu0 0
    %56 = vperm.xlu0 %55, %v43
    %v57 = vpop.permute.xlu0 %56
    %vm59 = vcmask 31744
    %v61 = vsel %vm59, %v38, 0
    %v64 = vsel %vm59, %v39, 0
    %v67 = vsel %vm59, %v40, 0
    %vm69 = vcmask 1043456
    %v71 = vsel %vm69, %v37, 0
    %73 = vmatprep.subr.mxu0 0.0
    %74 = vmatpush1.msra.mxu0 0.0
    %75 = vmatprep.subr.mxu0 0.0
    %76 = vmatpush1.msra.mxu0 0.0
    %77 = vmatprep.subr.mxu0 0.0
    %78 = vmatpush1.msra.mxu0 0.0
    %79 = vmatprep.subr.mxu0 0.0
    %80 = vmatpush1.msra.mxu0 0.0
    %81 = vmatprep.subr.mxu0 0.0
    %82 = vmatpush1.msra.mxu0 0.0
    %83 = vmatprep.subr.mxu0 0.0
    %84 = vmatpush1.msra.mxu0 0.0
    %85 = vmatprep.subr.mxu0 0.0
    %86 = vmatpush1.msra.mxu0 0.0
    %87 = vmatprep.subr.mxu0 0.0
    %88 = vmatpush1.msra.mxu0 0.0
    %89 = vmatprep.subr.mxu0 0.0
    %90 = vmatpush1.msra.mxu0 0.0
    %91 = vmatprep.subr.mxu0 0.0
    %92 = vmatpush1.msra.mxu0 0.0
    %93 = vmatprep.subr.mxu0 0.0
    %94 = vmatpush1.msra.mxu0 0.0
    %95 = vmatprep.subr.mxu0 0.0
    %96 = vmatpush1.msra.mxu0 0.0
    %97 = vmatprep.subr.mxu0 0.0
    %98 = vmatpush1.msra.mxu0 0.0
    %99 = vmatprep.subr.mxu0 0.0
    %100 = vmatpush1.msra.mxu0 0.0
    %101 = vmatprep.subr.mxu0 0.0
    %102 = vmatpush1.msra.mxu0 0.0
    %103 = vmatprep.subr.mxu0 0.0
    %v104 = vand.u32 %v71, 4294901760
    %105 = vmatpush1.msra.mxu0 %v104
    %106 = vmatprep.subr.mxu0 0.0
    %107 = vmatpush2.msra.mxu0 0.0
    %108 = vmatprep.subr.mxu0 0.0
    %109 = vmatpush2.msra.mxu0 0.0
    %110 = vmatprep.subr.mxu0 0.0
    %111 = vmatpush2.msra.mxu0 0.0
    %112 = vmatprep.subr.mxu0 0.0
    %113 = vmatpush2.msra.mxu0 0.0
    %114 = vmatprep.subr.mxu0 0.0
    %115 = vmatpush2.msra.mxu0 0.0
    %116 = vmatprep.subr.mxu0 0.0
    %117 = vmatpush2.msra.mxu0 0.0
    %118 = vmatprep.subr.mxu0 0.0
    %119 = vmatpush2.msra.mxu0 0.0
    %120 = vmatprep.subr.mxu0 0.0
    %121 = vmatpush2.msra.mxu0 0.0
    %122 = vmatprep.subr.mxu0 0.0
    %123 = vmatpush2.msra.mxu0 0.0
    %124 = vmatprep.subr.mxu0 0.0
    %125 = vmatpush2.msra.mxu0 0.0
    %126 = vmatprep.subr.mxu0 0.0
    %127 = vmatpush2.msra.mxu0 0.0
    %128 = vmatprep.subr.mxu0 0.0
    %129 = vmatpush2.msra.mxu0 0.0
    %130 = vmatprep.subr.mxu0 0.0
    %131 = vmatpush2.msra.mxu0 0.0
    %132 = vmatprep.subr.mxu0 0.0
    %133 = vmatpush2.msra.mxu0 0.0
    %134 = vmatprep.subr.mxu0 0.0
    %135 = vmatpush2.msra.mxu0 0.0
    %136 = vmatprep.subr.mxu0 0.0
    %137 = vmatpush2.msra.mxu0 0.0
    %138 = vmatprep.mubr.f32.mxu0 0.0
    %v139 = vand.u32 %v61, 4294901760
    %v140 = vsub.f32 %v61, %v139
    %v141 = vand.u32 %v140, 4294901760
    %v142 = vsub.f32 %v140, %v141
    %v143 = vand.u32 %v142, 4294901760
    %144 = vmatmul.mubr.f32.gmra.mxu0 %v143
    %v145 = vpop.f32.mrf.mxu0
    %v146 = vadd.f32 %v47, %v145
    %v147 = vpop.f32.mrf.mxu0
    %148 = vmatprep.mubr.f32.mxu0 0.0
    %v149 = vand.u32 %v64, 4294901760
    %v150 = vsub.f32 %v64, %v149
    %v151 = vand.u32 %v150, 4294901760
    %v152 = vsub.f32 %v150, %v151
    %v153 = vand.u32 %v152, 4294901760
    %154 = vmatmul.mubr.f32.gmra.mxu0 %v153
    %v155 = vpop.f32.mrf.mxu0
    %v156 = vadd.f32 %v52, %v155
    %v157 = vpop.f32.mrf.mxu0
    %158 = vmatprep.mubr.f32.mxu0 0.0
    %v159 = vand.u32 %v67, 4294901760
    %v160 = vsub.f32 %v67, %v159
    %v161 = vand.u32 %v160, 4294901760
    %v162 = vsub.f32 %v160, %v161
    %v163 = vand.u32 %v162, 4294901760
    %164 = vmatmul.mubr.f32.gmra.mxu0 %v163
    %v165 = vpop.f32.mrf.mxu0
    %v166 = vadd.f32 %v57, %v165
    %v167 = vpop.f32.mrf.mxu0
    %168 = vdwg.mxu0
    %169 = vmatprep.subr.mxu0 0.0
    %170 = vmatpush1.msra.mxu0 0.0
    %171 = vmatprep.subr.mxu0 0.0
    %172 = vmatpush1.msra.mxu0 0.0
    %173 = vmatprep.subr.mxu0 0.0
    %174 = vmatpush1.msra.mxu0 0.0
    %175 = vmatprep.subr.mxu0 0.0
    %176 = vmatpush1.msra.mxu0 0.0
    %177 = vmatprep.subr.mxu0 0.0
    %178 = vmatpush1.msra.mxu0 0.0
    %179 = vmatprep.subr.mxu0 0.0
    %180 = vmatpush1.msra.mxu0 0.0
    %181 = vmatprep.subr.mxu0 0.0
    %182 = vmatpush1.msra.mxu0 0.0
    %183 = vmatprep.subr.mxu0 0.0
    %184 = vmatpush1.msra.mxu0 0.0
    %185 = vmatprep.subr.mxu0 0.0
    %186 = vmatpush1.msra.mxu0 0.0
    %187 = vmatprep.subr.mxu0 0.0
    %188 = vmatpush1.msra.mxu0 0.0
    %189 = vmatprep.subr.mxu0 0.0
    %190 = vmatpush1.msra.mxu0 0.0
    %191 = vmatprep.subr.mxu0 0.0
    %192 = vmatpush1.msra.mxu0 0.0
    %193 = vmatprep.subr.mxu0 0.0
    %194 = vmatpush1.msra.mxu0 0.0
    %195 = vmatprep.subr.mxu0 0.0
    %196 = vmatpush1.msra.mxu0 0.0
    %197 = vmatprep.subr.mxu0 0.0
    %198 = vmatpush1.msra.mxu0 0.0
    %199 = vmatprep.subr.mxu0 0.0
    %v200 = vand.u32 %v71, 4294901760
    %v201 = vsub.f32 %v71, %v200
    %v202 = vand.u32 %v201, 4294901760
    %v203 = vsub.f32 %v201, %v202
    %v204 = vand.u32 %v203, 4294901760
    %205 = vmatpush1.msra.mxu0 %v204
    %206 = vmatprep.subr.mxu0 0.0
    %207 = vmatpush2.msra.mxu0 0.0
    %208 = vmatprep.subr.mxu0 0.0
    %209 = vmatpush2.msra.mxu0 0.0
    %210 = vmatprep.subr.mxu0 0.0
    %211 = vmatpush2.msra.mxu0 0.0
    %212 = vmatprep.subr.mxu0 0.0
    %213 = vmatpush2.msra.mxu0 0.0
    %214 = vmatprep.subr.mxu0 0.0
    %215 = vmatpush2.msra.mxu0 0.0
    %216 = vmatprep.subr.mxu0 0.0
    %217 = vmatpush2.msra.mxu0 0.0
    %218 = vmatprep.subr.mxu0 0.0
    %219 = vmatpush2.msra.mxu0 0.0
    %220 = vmatprep.subr.mxu0 0.0
    %221 = vmatpush2.msra.mxu0 0.0
    %222 = vmatprep.subr.mxu0 0.0
    %223 = vmatpush2.msra.mxu0 0.0
    %224 = vmatprep.subr.mxu0 0.0
    %225 = vmatpush2.msra.mxu0 0.0
    %226 = vmatprep.subr.mxu0 0.0
    %227 = vmatpush2.msra.mxu0 0.0
    %228 = vmatprep.subr.mxu0 0.0
    %229 = vmatpush2.msra.mxu0 0.0
    %230 = vmatprep.subr.mxu0 0.0
    %231 = vmatpush2.msra.mxu0 0.0
    %232 = vmatprep.subr.mxu0 0.0
    %233 = vmatpush2.msra.mxu0 0.0
    %234 = vmatprep.subr.mxu0 0.0
    %235 = vmatpush2.msra.mxu0 0.0
    %236 = vmatprep.subr.mxu0 0.0
    %237 = vmatpush2.msra.mxu0 0.0
    %238 = vmatprep.mubr.f32.mxu0 0.0
    %v239 = vand.u32 %v61, 4294901760
    %240 = vmatmul.mubr.f32.gmra.mxu0 %v239
    %v241 = vpop.f32.mrf.mxu0
    %v242 = vadd.f32 %v146, %v241
    %v243 = vpop.f32.mrf.mxu0
    %244 = vmatprep.mubr.f32.mxu0 0.0
    %v245 = vand.u32 %v64, 4294901760
    %246 = vmatmul.mubr.f32.gmra.mxu0 %v245
    %v247 = vpop.f32.mrf.mxu0
    %v248 = vadd.f32 %v156, %v247
    %v249 = vpop.f32.mrf.mxu0
    %250 = vmatprep.mubr.f32.mxu0 0.0
    %v251 = vand.u32 %v67, 4294901760
    %252 = vmatmul.mubr.f32.gmra.mxu0 %v251
    %v253 = vpop.f32.mrf.mxu0
    %v254 = vadd.f32 %v166, %v253
    %v255 = vpop.f32.mrf.mxu0
    %256 = vdwg.mxu0
    %257 = vmatprep.subr.mxu0 0.0
    %258 = vmatpush1.msra.mxu0 0.0
    %259 = vmatprep.subr.mxu0 0.0
    %260 = vmatpush1.msra.mxu0 0.0
    %261 = vmatprep.subr.mxu0 0.0
    %262 = vmatpush1.msra.mxu0 0.0
    %263 = vmatprep.subr.mxu0 0.0
    %264 = vmatpush1.msra.mxu0 0.0
    %265 = vmatprep.subr.mxu0 0.0
    %266 = vmatpush1.msra.mxu0 0.0
    %267 = vmatprep.subr.mxu0 0.0
    %268 = vmatpush1.msra.mxu0 0.0
    %269 = vmatprep.subr.mxu0 0.0
    %270 = vmatpush1.msra.mxu0 0.0
    %271 = vmatprep.subr.mxu0 0.0
    %272 = vmatpush1.msra.mxu0 0.0
    %273 = vmatprep.subr.mxu0 0.0
    %274 = vmatpush1.msra.mxu0 0.0
    %275 = vmatprep.subr.mxu0 0.0
    %276 = vmatpush1.msra.mxu0 0.0
    %277 = vmatprep.subr.mxu0 0.0
    %278 = vmatpush1.msra.mxu0 0.0
    %279 = vmatprep.subr.mxu0 0.0
    %280 = vmatpush1.msra.mxu0 0.0
    %281 = vmatprep.subr.mxu0 0.0
    %282 = vmatpush1.msra.mxu0 0.0
    %283 = vmatprep.subr.mxu0 0.0
    %284 = vmatpush1.msra.mxu0 0.0
    %285 = vmatprep.subr.mxu0 0.0
    %286 = vmatpush1.msra.mxu0 0.0
    %287 = vmatprep.subr.mxu0 0.0
    %v288 = vand.u32 %v71, 4294901760
    %v289 = vsub.f32 %v71, %v288
    %290 = vmatpush1.msra.mxu0 %v289
    %291 = vmatprep.subr.mxu0 0.0
    %292 = vmatpush2.msra.mxu0 0.0
    %293 = vmatprep.subr.mxu0 0.0
    %294 = vmatpush2.msra.mxu0 0.0
    %295 = vmatprep.subr.mxu0 0.0
    %296 = vmatpush2.msra.mxu0 0.0
    %297 = vmatprep.subr.mxu0 0.0
    %298 = vmatpush2.msra.mxu0 0.0
    %299 = vmatprep.subr.mxu0 0.0
    %300 = vmatpush2.msra.mxu0 0.0
    %301 = vmatprep.subr.mxu0 0.0
    %302 = vmatpush2.msra.mxu0 0.0
    %303 = vmatprep.subr.mxu0 0.0
    %304 = vmatpush2.msra.mxu0 0.0
    %305 = vmatprep.subr.mxu0 0.0
    %306 = vmatpush2.msra.mxu0 0.0
    %307 = vmatprep.subr.mxu0 0.0
    %308 = vmatpush2.msra.mxu0 0.0
    %309 = vmatprep.subr.mxu0 0.0
    %310 = vmatpush2.msra.mxu0 0.0
    %311 = vmatprep.subr.mxu0 0.0
    %312 = vmatpush2.msra.mxu0 0.0
    %313 = vmatprep.subr.mxu0 0.0
    %314 = vmatpush2.msra.mxu0 0.0
    %315 = vmatprep.subr.mxu0 0.0
    %316 = vmatpush2.msra.mxu0 0.0
    %317 = vmatprep.subr.mxu0 0.0
    %318 = vmatpush2.msra.mxu0 0.0
    %319 = vmatprep.subr.mxu0 0.0
    %320 = vmatpush2.msra.mxu0 0.0
    %321 = vmatprep.subr.mxu0 0.0
    %322 = vmatpush2.msra.mxu0 0.0
    %323 = vmatprep.mubr.f32.mxu0 0.0
    %v324 = vand.u32 %v61, 4294901760
    %v325 = vsub.f32 %v61, %v324
    %326 = vmatmul.mubr.f32.gmra.mxu0 %v325
    %v327 = vpop.f32.mrf.mxu0
    %v328 = vadd.f32 %v242, %v327
    %v329 = vpop.f32.mrf.mxu0
    %330 = vmatprep.mubr.f32.mxu0 0.0
    %v331 = vand.u32 %v64, 4294901760
    %v332 = vsub.f32 %v64, %v331
    %333 = vmatmul.mubr.f32.gmra.mxu0 %v332
    %v334 = vpop.f32.mrf.mxu0
    %v335 = vadd.f32 %v248, %v334
    %v336 = vpop.f32.mrf.mxu0
    %337 = vmatprep.mubr.f32.mxu0 0.0
    %v338 = vand.u32 %v67, 4294901760
    %v339 = vsub.f32 %v67, %v338
    %340 = vmatmul.mubr.f32.gmra.mxu0 %v339
    %v341 = vpop.f32.mrf.mxu0
    %v342 = vadd.f32 %v254, %v341
    %v343 = vpop.f32.mrf.mxu0
    %344 = vdwg.mxu0
    %345 = vmatprep.subr.mxu0 0.0
    %346 = vmatpush1.msra.mxu0 0.0
    %347 = vmatprep.subr.mxu0 0.0
    %348 = vmatpush1.msra.mxu0 0.0
    %349 = vmatprep.subr.mxu0 0.0
    %350 = vmatpush1.msra.mxu0 0.0
    %351 = vmatprep.subr.mxu0 0.0
    %352 = vmatpush1.msra.mxu0 0.0
    %353 = vmatprep.subr.mxu0 0.0
    %354 = vmatpush1.msra.mxu0 0.0
    %355 = vmatprep.subr.mxu0 0.0
    %356 = vmatpush1.msra.mxu0 0.0
    %357 = vmatprep.subr.mxu0 0.0
    %358 = vmatpush1.msra.mxu0 0.0
    %359 = vmatprep.subr.mxu0 0.0
    %360 = vmatpush1.msra.mxu0 0.0
    %361 = vmatprep.subr.mxu0 0.0
    %362 = vmatpush1.msra.mxu0 0.0
    %363 = vmatprep.subr.mxu0 0.0
    %364 = vmatpush1.msra.mxu0 0.0
    %365 = vmatprep.subr.mxu0 0.0
    %366 = vmatpush1.msra.mxu0 0.0
    %367 = vmatprep.subr.mxu0 0.0
    %368 = vmatpush1.msra.mxu0 0.0
    %369 = vmatprep.subr.mxu0 0.0
    %370 = vmatpush1.msra.mxu0 0.0
    %371 = vmatprep.subr.mxu0 0.0
    %372 = vmatpush1.msra.mxu0 0.0
    %373 = vmatprep.subr.mxu0 0.0
    %374 = vmatpush1.msra.mxu0 0.0
    %375 = vmatprep.subr.mxu0 0.0
    %v376 = vand.u32 %v71, 4294901760
    %377 = vmatpush1.msra.mxu0 %v376
    %378 = vmatprep.subr.mxu0 0.0
    %379 = vmatpush2.msra.mxu0 0.0
    %380 = vmatprep.subr.mxu0 0.0
    %381 = vmatpush2.msra.mxu0 0.0
    %382 = vmatprep.subr.mxu0 0.0
    %383 = vmatpush2.msra.mxu0 0.0
    %384 = vmatprep.subr.mxu0 0.0
    %385 = vmatpush2.msra.mxu0 0.0
    %386 = vmatprep.subr.mxu0 0.0
    %387 = vmatpush2.msra.mxu0 0.0
    %388 = vmatprep.subr.mxu0 0.0
    %389 = vmatpush2.msra.mxu0 0.0
    %390 = vmatprep.subr.mxu0 0.0
    %391 = vmatpush2.msra.mxu0 0.0
    %392 = vmatprep.subr.mxu0 0.0
    %393 = vmatpush2.msra.mxu0 0.0
    %394 = vmatprep.subr.mxu0 0.0
    %395 = vmatpush2.msra.mxu0 0.0
    %396 = vmatprep.subr.mxu0 0.0
    %397 = vmatpush2.msra.mxu0 0.0
    %398 = vmatprep.subr.mxu0 0.0
    %399 = vmatpush2.msra.mxu0 0.0
    %400 = vmatprep.subr.mxu0 0.0
    %401 = vmatpush2.msra.mxu0 0.0
    %402 = vmatprep.subr.mxu0 0.0
    %403 = vmatpush2.msra.mxu0 0.0
    %404 = vmatprep.subr.mxu0 0.0
    %405 = vmatpush2.msra.mxu0 0.0
    %406 = vmatprep.subr.mxu0 0.0
    %407 = vmatpush2.msra.mxu0 0.0
    %408 = vmatprep.subr.mxu0 0.0
    %409 = vmatpush2.msra.mxu0 0.0
    %410 = vmatprep.mubr.f32.mxu0 0.0
    %v411 = vand.u32 %v61, 4294901760
    %v412 = vsub.f32 %v61, %v411
    %v413 = vand.u32 %v412, 4294901760
    %414 = vmatmul.mubr.f32.gmra.mxu0 %v413
    %v415 = vpop.f32.mrf.mxu0
    %v416 = vadd.f32 %v328, %v415
    %v417 = vpop.f32.mrf.mxu0
    %418 = vmatprep.mubr.f32.mxu0 0.0
    %v419 = vand.u32 %v64, 4294901760
    %v420 = vsub.f32 %v64, %v419
    %v421 = vand.u32 %v420, 4294901760
    %422 = vmatmul.mubr.f32.gmra.mxu0 %v421
    %v423 = vpop.f32.mrf.mxu0
    %v424 = vadd.f32 %v335, %v423
    %v425 = vpop.f32.mrf.mxu0
    %426 = vmatprep.mubr.f32.mxu0 0.0
    %v427 = vand.u32 %v67, 4294901760
    %v428 = vsub.f32 %v67, %v427
    %v429 = vand.u32 %v428, 4294901760
    %430 = vmatmul.mubr.f32.gmra.mxu0 %v429
    %v431 = vpop.f32.mrf.mxu0
    %v432 = vadd.f32 %v342, %v431
    %v433 = vpop.f32.mrf.mxu0
    %434 = vdwg.mxu0
    %435 = vmatprep.subr.mxu0 0.0
    %436 = vmatpush1.msra.mxu0 0.0
    %437 = vmatprep.subr.mxu0 0.0
    %438 = vmatpush1.msra.mxu0 0.0
    %439 = vmatprep.subr.mxu0 0.0
    %440 = vmatpush1.msra.mxu0 0.0
    %441 = vmatprep.subr.mxu0 0.0
    %442 = vmatpush1.msra.mxu0 0.0
    %443 = vmatprep.subr.mxu0 0.0
    %444 = vmatpush1.msra.mxu0 0.0
    %445 = vmatprep.subr.mxu0 0.0
    %446 = vmatpush1.msra.mxu0 0.0
    %447 = vmatprep.subr.mxu0 0.0
    %448 = vmatpush1.msra.mxu0 0.0
    %449 = vmatprep.subr.mxu0 0.0
    %450 = vmatpush1.msra.mxu0 0.0
    %451 = vmatprep.subr.mxu0 0.0
    %452 = vmatpush1.msra.mxu0 0.0
    %453 = vmatprep.subr.mxu0 0.0
    %454 = vmatpush1.msra.mxu0 0.0
    %455 = vmatprep.subr.mxu0 0.0
    %456 = vmatpush1.msra.mxu0 0.0
    %457 = vmatprep.subr.mxu0 0.0
    %458 = vmatpush1.msra.mxu0 0.0
    %459 = vmatprep.subr.mxu0 0.0
    %460 = vmatpush1.msra.mxu0 0.0
    %461 = vmatprep.subr.mxu0 0.0
    %462 = vmatpush1.msra.mxu0 0.0
    %463 = vmatprep.subr.mxu0 0.0
    %464 = vmatpush1.msra.mxu0 0.0
    %465 = vmatprep.subr.mxu0 0.0
    %v466 = vand.u32 %v71, 4294901760
    %v467 = vsub.f32 %v71, %v466
    %v468 = vand.u32 %v467, 4294901760
    %469 = vmatpush1.msra.mxu0 %v468
    %470 = vmatprep.subr.mxu0 0.0
    %471 = vmatpush2.msra.mxu0 0.0
    %472 = vmatprep.subr.mxu0 0.0
    %473 = vmatpush2.msra.mxu0 0.0
    %474 = vmatprep.subr.mxu0 0.0
    %475 = vmatpush2.msra.mxu0 0.0
    %476 = vmatprep.subr.mxu0 0.0
    %477 = vmatpush2.msra.mxu0 0.0
    %478 = vmatprep.subr.mxu0 0.0
    %479 = vmatpush2.msra.mxu0 0.0
    %480 = vmatprep.subr.mxu0 0.0
    %481 = vmatpush2.msra.mxu0 0.0
    %482 = vmatprep.subr.mxu0 0.0
    %483 = vmatpush2.msra.mxu0 0.0
    %484 = vmatprep.subr.mxu0 0.0
    %485 = vmatpush2.msra.mxu0 0.0
    %486 = vmatprep.subr.mxu0 0.0
    %487 = vmatpush2.msra.mxu0 0.0
    %488 = vmatprep.subr.mxu0 0.0
    %489 = vmatpush2.msra.mxu0 0.0
    %490 = vmatprep.subr.mxu0 0.0
    %491 = vmatpush2.msra.mxu0 0.0
    %492 = vmatprep.subr.mxu0 0.0
    %493 = vmatpush2.msra.mxu0 0.0
    %494 = vmatprep.subr.mxu0 0.0
    %495 = vmatpush2.msra.mxu0 0.0
    %496 = vmatprep.subr.mxu0 0.0
    %497 = vmatpush2.msra.mxu0 0.0
    %498 = vmatprep.subr.mxu0 0.0
    %499 = vmatpush2.msra.mxu0 0.0
    %500 = vmatprep.subr.mxu0 0.0
    %501 = vmatpush2.msra.mxu0 0.0
    %502 = vmatprep.mubr.f32.mxu0 0.0
    %v503 = vand.u32 %v61, 4294901760
    %504 = vmatmul.mubr.f32.gmra.mxu0 %v503
    %v505 = vpop.f32.mrf.mxu0
    %v506 = vadd.f32 %v416, %v505
    %v507 = vpop.f32.mrf.mxu0
    %508 = vmatprep.mubr.f32.mxu0 0.0
    %v509 = vand.u32 %v64, 4294901760
    %510 = vmatmul.mubr.f32.gmra.mxu0 %v509
    %v511 = vpop.f32.mrf.mxu0
    %v512 = vadd.f32 %v424, %v511
    %v513 = vpop.f32.mrf.mxu0
    %514 = vmatprep.mubr.f32.mxu0 0.0
    %v515 = vand.u32 %v67, 4294901760
    %516 = vmatmul.mubr.f32.gmra.mxu0 %v515
    %v517 = vpop.f32.mrf.mxu0
    %v518 = vadd.f32 %v432, %v517
    %v519 = vpop.f32.mrf.mxu0
    %520 = vdwg.mxu0
    %521 = vmatprep.subr.mxu0 0.0
    %522 = vmatpush1.msra.mxu0 0.0
    %523 = vmatprep.subr.mxu0 0.0
    %524 = vmatpush1.msra.mxu0 0.0
    %525 = vmatprep.subr.mxu0 0.0
    %526 = vmatpush1.msra.mxu0 0.0
    %527 = vmatprep.subr.mxu0 0.0
    %528 = vmatpush1.msra.mxu0 0.0
    %529 = vmatprep.subr.mxu0 0.0
    %530 = vmatpush1.msra.mxu0 0.0
    %531 = vmatprep.subr.mxu0 0.0
    %532 = vmatpush1.msra.mxu0 0.0
    %533 = vmatprep.subr.mxu0 0.0
    %534 = vmatpush1.msra.mxu0 0.0
    %535 = vmatprep.subr.mxu0 0.0
    %536 = vmatpush1.msra.mxu0 0.0
    %537 = vmatprep.subr.mxu0 0.0
    %538 = vmatpush1.msra.mxu0 0.0
    %539 = vmatprep.subr.mxu0 0.0
    %540 = vmatpush1.msra.mxu0 0.0
    %541 = vmatprep.subr.mxu0 0.0
    %542 = vmatpush1.msra.mxu0 0.0
    %543 = vmatprep.subr.mxu0 0.0
    %544 = vmatpush1.msra.mxu0 0.0
    %545 = vmatprep.subr.mxu0 0.0
    %546 = vmatpush1.msra.mxu0 0.0
    %547 = vmatprep.subr.mxu0 0.0
    %548 = vmatpush1.msra.mxu0 0.0
    %549 = vmatprep.subr.mxu0 0.0
    %550 = vmatpush1.msra.mxu0 0.0
    %551 = vmatprep.subr.mxu0 0.0
    %v552 = vand.u32 %v71, 4294901760
    %553 = vmatpush1.msra.mxu0 %v552
    %554 = vmatprep.subr.mxu0 0.0
    %555 = vmatpush2.msra.mxu0 0.0
    %556 = vmatprep.subr.mxu0 0.0
    %557 = vmatpush2.msra.mxu0 0.0
    %558 = vmatprep.subr.mxu0 0.0
    %559 = vmatpush2.msra.mxu0 0.0
    %560 = vmatprep.subr.mxu0 0.0
    %561 = vmatpush2.msra.mxu0 0.0
    %562 = vmatprep.subr.mxu0 0.0
    %563 = vmatpush2.msra.mxu0 0.0
    %564 = vmatprep.subr.mxu0 0.0
    %565 = vmatpush2.msra.mxu0 0.0
    %566 = vmatprep.subr.mxu0 0.0
    %567 = vmatpush2.msra.mxu0 0.0
    %568 = vmatprep.subr.mxu0 0.0
    %569 = vmatpush2.msra.mxu0 0.0
    %570 = vmatprep.subr.mxu0 0.0
    %571 = vmatpush2.msra.mxu0 0.0
    %572 = vmatprep.subr.mxu0 0.0
    %573 = vmatpush2.msra.mxu0 0.0
    %574 = vmatprep.subr.mxu0 0.0
    %575 = vmatpush2.msra.mxu0 0.0
    %576 = vmatprep.subr.mxu0 0.0
    %577 = vmatpush2.msra.mxu0 0.0
    %578 = vmatprep.subr.mxu0 0.0
    %579 = vmatpush2.msra.mxu0 0.0
    %580 = vmatprep.subr.mxu0 0.0
    %581 = vmatpush2.msra.mxu0 0.0
    %582 = vmatprep.subr.mxu0 0.0
    %583 = vmatpush2.msra.mxu0 0.0
    %584 = vmatprep.subr.mxu0 0.0
    %585 = vmatpush2.msra.mxu0 0.0
    %586 = vmatprep.mubr.f32.mxu0 0.0
    %v587 = vand.u32 %v61, 4294901760
    %588 = vmatmul.mubr.f32.gmra.mxu0 %v587
    %v589 = vpop.f32.mrf.mxu0
    %v590 = vadd.f32 %v506, %v589
    %v591 = vpop.f32.mrf.mxu0
    %592 = vmatprep.mubr.f32.mxu0 0.0
    %v593 = vand.u32 %v64, 4294901760
    %594 = vmatmul.mubr.f32.gmra.mxu0 %v593
    %v595 = vpop.f32.mrf.mxu0
    %v596 = vadd.f32 %v512, %v595
    %v597 = vpop.f32.mrf.mxu0
    %598 = vmatprep.mubr.f32.mxu0 0.0
    %v599 = vand.u32 %v67, 4294901760
    %600 = vmatmul.mubr.f32.gmra.mxu0 %v599
    %v601 = vpop.f32.mrf.mxu0
    %v602 = vadd.f32 %v518, %v601
    %v603 = vpop.f32.mrf.mxu0
    %604 = vdwg.mxu0
    %v605 = vmax.f32 %v590, 0.0
    %v606 = vmax.f32 %v596, 0.0
    %v607 = vmax.f32 %v602, 0.0
    %v608 = vld [vmem:[%s2] sm:$0x7]
    %v609 = vld [vmem:[%s3] sm:$0x7]
    %611 = vset.pattern.permute.xlu0 0
    %612 = vperm.xlu0 %611, %v609
    %v613 = vpop.permute.xlu0 %612
    %vm615 = vcmask 195584
    %v617 = vsel %vm615, %v608, 0
    %619 = vmatprep.subr.mxu0 0.0
    %620 = vmatpush1.msra.mxu0 0.0
    %621 = vmatprep.subr.mxu0 0.0
    %622 = vmatpush1.msra.mxu0 0.0
    %623 = vmatprep.subr.mxu0 0.0
    %624 = vmatpush1.msra.mxu0 0.0
    %625 = vmatprep.subr.mxu0 0.0
    %626 = vmatpush1.msra.mxu0 0.0
    %627 = vmatprep.subr.mxu0 0.0
    %628 = vmatpush1.msra.mxu0 0.0
    %629 = vmatprep.subr.mxu0 0.0
    %630 = vmatpush1.msra.mxu0 0.0
    %631 = vmatprep.subr.mxu0 0.0
    %632 = vmatpush1.msra.mxu0 0.0
    %633 = vmatprep.subr.mxu0 0.0
    %634 = vmatpush1.msra.mxu0 0.0
    %635 = vmatprep.subr.mxu0 0.0
    %636 = vmatpush1.msra.mxu0 0.0
    %637 = vmatprep.subr.mxu0 0.0
    %638 = vmatpush1.msra.mxu0 0.0
    %639 = vmatprep.subr.mxu0 0.0
    %640 = vmatpush1.msra.mxu0 0.0
    %641 = vmatprep.subr.mxu0 0.0
    %642 = vmatpush1.msra.mxu0 0.0
    %643 = vmatprep.subr.mxu0 0.0
    %644 = vmatpush1.msra.mxu0 0.0
    %645 = vmatprep.subr.mxu0 0.0
    %v646 = vand.u32 %v607, 4294901760
    %647 = vmatpush1.msra.mxu0 %v646
    %648 = vmatprep.subr.mxu0 0.0
    %v649 = vand.u32 %v606, 4294901760
    %650 = vmatpush1.msra.mxu0 %v649
    %651 = vmatprep.subr.mxu0 0.0
    %v652 = vand.u32 %v605, 4294901760
    %653 = vmatpush1.msra.mxu0 %v652
    %654 = vmatprep.subr.mxu0 0.0
    %655 = vmatpush2.msra.mxu0 0.0
    %656 = vmatprep.subr.mxu0 0.0
    %657 = vmatpush2.msra.mxu0 0.0
    %658 = vmatprep.subr.mxu0 0.0
    %659 = vmatpush2.msra.mxu0 0.0
    %660 = vmatprep.subr.mxu0 0.0
    %661 = vmatpush2.msra.mxu0 0.0
    %662 = vmatprep.subr.mxu0 0.0
    %663 = vmatpush2.msra.mxu0 0.0
    %664 = vmatprep.subr.mxu0 0.0
    %665 = vmatpush2.msra.mxu0 0.0
    %666 = vmatprep.subr.mxu0 0.0
    %667 = vmatpush2.msra.mxu0 0.0
    %668 = vmatprep.subr.mxu0 0.0
    %669 = vmatpush2.msra.mxu0 0.0
    %670 = vmatprep.subr.mxu0 0.0
    %671 = vmatpush2.msra.mxu0 0.0
    %672 = vmatprep.subr.mxu0 0.0
    %673 = vmatpush2.msra.mxu0 0.0
    %674 = vmatprep.subr.mxu0 0.0
    %675 = vmatpush2.msra.mxu0 0.0
    %676 = vmatprep.subr.mxu0 0.0
    %677 = vmatpush2.msra.mxu0 0.0
    %678 = vmatprep.subr.mxu0 0.0
    %679 = vmatpush2.msra.mxu0 0.0
    %680 = vmatprep.subr.mxu0 0.0
    %681 = vmatpush2.msra.mxu0 0.0
    %682 = vmatprep.subr.mxu0 0.0
    %683 = vmatpush2.msra.mxu0 0.0
    %684 = vmatprep.subr.mxu0 0.0
    %685 = vmatpush2.msra.mxu0 0.0
    %686 = vmatprep.mubr.f32.mxu0 0.0
    %v687 = vand.u32 %v617, 4294901760
    %v688 = vsub.f32 %v617, %v687
    %v689 = vand.u32 %v688, 4294901760
    %v690 = vsub.f32 %v688, %v689
    %v691 = vand.u32 %v690, 4294901760
    %692 = vmatmul.mubr.f32.gmra.mxu0 %v691
    %v693 = vpop.f32.mrf.mxu0
    %v694 = vadd.f32 %v613, %v693
    %v695 = vpop.f32.mrf.mxu0
    %696 = vdwg.mxu0
    %697 = vmatprep.subr.mxu0 0.0
    %698 = vmatpush1.msra.mxu0 0.0
    %699 = vmatprep.subr.mxu0 0.0
    %700 = vmatpush1.msra.mxu0 0.0
    %701 = vmatprep.subr.mxu0 0.0
    %702 = vmatpush1.msra.mxu0 0.0
    %703 = vmatprep.subr.mxu0 0.0
    %704 = vmatpush1.msra.mxu0 0.0
    %705 = vmatprep.subr.mxu0 0.0
    %706 = vmatpush1.msra.mxu0 0.0
    %707 = vmatprep.subr.mxu0 0.0
    %708 = vmatpush1.msra.mxu0 0.0
    %709 = vmatprep.subr.mxu0 0.0
    %710 = vmatpush1.msra.mxu0 0.0
    %711 = vmatprep.subr.mxu0 0.0
    %712 = vmatpush1.msra.mxu0 0.0
    %713 = vmatprep.subr.mxu0 0.0
    %714 = vmatpush1.msra.mxu0 0.0
    %715 = vmatprep.subr.mxu0 0.0
    %716 = vmatpush1.msra.mxu0 0.0
    %717 = vmatprep.subr.mxu0 0.0
    %718 = vmatpush1.msra.mxu0 0.0
    %719 = vmatprep.subr.mxu0 0.0
    %720 = vmatpush1.msra.mxu0 0.0
    %721 = vmatprep.subr.mxu0 0.0
    %722 = vmatpush1.msra.mxu0 0.0
    %723 = vmatprep.subr.mxu0 0.0
    %v724 = vand.u32 %v607, 4294901760
    %v725 = vsub.f32 %v607, %v724
    %v726 = vand.u32 %v725, 4294901760
    %v727 = vsub.f32 %v725, %v726
    %v728 = vand.u32 %v727, 4294901760
    %729 = vmatpush1.msra.mxu0 %v728
    %730 = vmatprep.subr.mxu0 0.0
    %v731 = vand.u32 %v606, 4294901760
    %v732 = vsub.f32 %v606, %v731
    %v733 = vand.u32 %v732, 4294901760
    %v734 = vsub.f32 %v732, %v733
    %v735 = vand.u32 %v734, 4294901760
    %736 = vmatpush1.msra.mxu0 %v735
    %737 = vmatprep.subr.mxu0 0.0
    %v738 = vand.u32 %v605, 4294901760
    %v739 = vsub.f32 %v605, %v738
    %v740 = vand.u32 %v739, 4294901760
    %v741 = vsub.f32 %v739, %v740
    %v742 = vand.u32 %v741, 4294901760
    %743 = vmatpush1.msra.mxu0 %v742
    %744 = vmatprep.subr.mxu0 0.0
    %745 = vmatpush2.msra.mxu0 0.0
    %746 = vmatprep.subr.mxu0 0.0
    %747 = vmatpush2.msra.mxu0 0.0
    %748 = vmatprep.subr.mxu0 0.0
    %749 = vmatpush2.msra.mxu0 0.0
    %750 = vmatprep.subr.mxu0 0.0
    %751 = vmatpush2.msra.mxu0 0.0
    %752 = vmatprep.subr.mxu0 0.0
    %753 = vmatpush2.msra.mxu0 0.0
    %754 = vmatprep.subr.mxu0 0.0
    %755 = vmatpush2.msra.mxu0 0.0
    %756 = vmatprep.subr.mxu0 0.0
    %757 = vmatpush2.msra.mxu0 0.0
    %758 = vmatprep.subr.mxu0 0.0
    %759 = vmatpush2.msra.mxu0 0.0
    %760 = vmatprep.subr.mxu0 0.0
    %761 = vmatpush2.msra.mxu0 0.0
    %762 = vmatprep.subr.mxu0 0.0
    %763 = vmatpush2.msra.mxu0 0.0
    %764 = vmatprep.subr.mxu0 0.0
    %765 = vmatpush2.msra.mxu0 0.0
    %766 = vmatprep.subr.mxu0 0.0
    %767 = vmatpush2.msra.mxu0 0.0
    %768 = vmatprep.subr.mxu0 0.0
    %769 = vmatpush2.msra.mxu0 0.0
    %770 = vmatprep.subr.mxu0 0.0
    %771 = vmatpush2.msra.mxu0 0.0
    %772 = vmatprep.subr.mxu0 0.0
    %773 = vmatpush2.msra.mxu0 0.0
    %774 = vmatprep.subr.mxu0 0.0
    %775 = vmatpush2.msra.mxu0 0.0
    %776 = vmatprep.mubr.f32.mxu0 0.0
    %v777 = vand.u32 %v617, 4294901760
    %778 = vmatmul.mubr.f32.gmra.mxu0 %v777
    %v779 = vpop.f32.mrf.mxu0
    %v780 = vadd.f32 %v694, %v779
    %v781 = vpop.f32.mrf.mxu0
    %782 = vdwg.mxu0
    %783 = vmatprep.subr.mxu0 0.0
    %784 = vmatpush1.msra.mxu0 0.0
    %785 = vmatprep.subr.mxu0 0.0
    %786 = vmatpush1.msra.mxu0 0.0
    %787 = vmatprep.subr.mxu0 0.0
    %788 = vmatpush1.msra.mxu0 0.0
    %789 = vmatprep.subr.mxu0 0.0
    %790 = vmatpush1.msra.mxu0 0.0
    %791 = vmatprep.subr.mxu0 0.0
    %792 = vmatpush1.msra.mxu0 0.0
    %793 = vmatprep.subr.mxu0 0.0
    %794 = vmatpush1.msra.mxu0 0.0
    %795 = vmatprep.subr.mxu0 0.0
    %796 = vmatpush1.msra.mxu0 0.0
    %797 = vmatprep.subr.mxu0 0.0
    %798 = vmatpush1.msra.mxu0 0.0
    %799 = vmatprep.subr.mxu0 0.0
    %800 = vmatpush1.msra.mxu0 0.0
    %801 = vmatprep.subr.mxu0 0.0
    %802 = vmatpush1.msra.mxu0 0.0
    %803 = vmatprep.subr.mxu0 0.0
    %804 = vmatpush1.msra.mxu0 0.0
    %805 = vmatprep.subr.mxu0 0.0
    %806 = vmatpush1.msra.mxu0 0.0
    %807 = vmatprep.subr.mxu0 0.0
    %808 = vmatpush1.msra.mxu0 0.0
    %809 = vmatprep.subr.mxu0 0.0
    %v810 = vand.u32 %v607, 4294901760
    %v811 = vsub.f32 %v607, %v810
    %812 = vmatpush1.msra.mxu0 %v811
    %813 = vmatprep.subr.mxu0 0.0
    %v814 = vand.u32 %v606, 4294901760
    %v815 = vsub.f32 %v606, %v814
    %816 = vmatpush1.msra.mxu0 %v815
    %817 = vmatprep.subr.mxu0 0.0
    %v818 = vand.u32 %v605, 4294901760
    %v819 = vsub.f32 %v605, %v818
    %820 = vmatpush1.msra.mxu0 %v819
    %821 = vmatprep.subr.mxu0 0.0
    %822 = vmatpush2.msra.mxu0 0.0
    %823 = vmatprep.subr.mxu0 0.0
    %824 = vmatpush2.msra.mxu0 0.0
    %825 = vmatprep.subr.mxu0 0.0
    %826 = vmatpush2.msra.mxu0 0.0
    %827 = vmatprep.subr.mxu0 0.0
    %828 = vmatpush2.msra.mxu0 0.0
    %829 = vmatprep.subr.mxu0 0.0
    %830 = vmatpush2.msra.mxu0 0.0
    %831 = vmatprep.subr.mxu0 0.0
    %832 = vmatpush2.msra.mxu0 0.0
    %833 = vmatprep.subr.mxu0 0.0
    %834 = vmatpush2.msra.mxu0 0.0
    %835 = vmatprep.subr.mxu0 0.0
    %836 = vmatpush2.msra.mxu0 0.0
    %837 = vmatprep.subr.mxu0 0.0
    %838 = vmatpush2.msra.mxu0 0.0
    %839 = vmatprep.subr.mxu0 0.0
    %840 = vmatpush2.msra.mxu0 0.0
    %841 = vmatprep.subr.mxu0 0.0
    %842 = vmatpush2.msra.mxu0 0.0
    %843 = vmatprep.subr.mxu0 0.0
    %844 = vmatpush2.msra.mxu0 0.0
    %845 = vmatprep.subr.mxu0 0.0
    %846 = vmatpush2.msra.mxu0 0.0
    %847 = vmatprep.subr.mxu0 0.0
    %848 = vmatpush2.msra.mxu0 0.0
    %849 = vmatprep.subr.mxu0 0.0
    %850 = vmatpush2.msra.mxu0 0.0
    %851 = vmatprep.subr.mxu0 0.0
    %852 = vmatpush2.msra.mxu0 0.0
    %853 = vmatprep.mubr.f32.mxu0 0.0
    %v854 = vand.u32 %v617, 4294901760
    %v855 = vsub.f32 %v617, %v854
    %856 = vmatmul.mubr.f32.gmra.mxu0 %v855
    %v857 = vpop.f32.mrf.mxu0
    %v858 = vadd.f32 %v780, %v857
    %v859 = vpop.f32.mrf.mxu0
    %860 = vdwg.mxu0
    %861 = vmatprep.subr.mxu0 0.0
    %862 = vmatpush1.msra.mxu0 0.0
    %863 = vmatprep.subr.mxu0 0.0
    %864 = vmatpush1.msra.mxu0 0.0
    %865 = vmatprep.subr.mxu0 0.0
    %866 = vmatpush1.msra.mxu0 0.0
    %867 = vmatprep.subr.mxu0 0.0
    %868 = vmatpush1.msra.mxu0 0.0
    %869 = vmatprep.subr.mxu0 0.0
    %870 = vmatpush1.msra.mxu0 0.0
    %871 = vmatprep.subr.mxu0 0.0
    %872 = vmatpush1.msra.mxu0 0.0
    %873 = vmatprep.subr.mxu0 0.0
    %874 = vmatpush1.msra.mxu0 0.0
    %875 = vmatprep.subr.mxu0 0.0
    %876 = vmatpush1.msra.mxu0 0.0
    %877 = vmatprep.subr.mxu0 0.0
    %878 = vmatpush1.msra.mxu0 0.0
    %879 = vmatprep.subr.mxu0 0.0
    %880 = vmatpush1.msra.mxu0 0.0
    %881 = vmatprep.subr.mxu0 0.0
    %882 = vmatpush1.msra.mxu0 0.0
    %883 = vmatprep.subr.mxu0 0.0
    %884 = vmatpush1.msra.mxu0 0.0
    %885 = vmatprep.subr.mxu0 0.0
    %886 = vmatpush1.msra.mxu0 0.0
    %887 = vmatprep.subr.mxu0 0.0
    %v888 = vand.u32 %v607, 4294901760
    %889 = vmatpush1.msra.mxu0 %v888
    %890 = vmatprep.subr.mxu0 0.0
    %v891 = vand.u32 %v606, 4294901760
    %892 = vmatpush1.msra.mxu0 %v891
    %893 = vmatprep.subr.mxu0 0.0
    %v894 = vand.u32 %v605, 4294901760
    %895 = vmatpush1.msra.mxu0 %v894
    %896 = vmatprep.subr.mxu0 0.0
    %897 = vmatpush2.msra.mxu0 0.0
    %898 = vmatprep.subr.mxu0 0.0
    %899 = vmatpush2.msra.mxu0 0.0
    %900 = vmatprep.subr.mxu0 0.0
    %901 = vmatpush2.msra.mxu0 0.0
    %902 = vmatprep.subr.mxu0 0.0
    %903 = vmatpush2.msra.mxu0 0.0
    %904 = vmatprep.subr.mxu0 0.0
    %905 = vmatpush2.msra.mxu0 0.0
    %906 = vmatprep.subr.mxu0 0.0
    %907 = vmatpush2.msra.mxu0 0.0
    %908 = vmatprep.subr.mxu0 0.0
    %909 = vmatpush2.msra.mxu0 0.0
    %910 = vmatprep.subr.mxu0 0.0
    %911 = vmatpush2.msra.mxu0 0.0
    %912 = vmatprep.subr.mxu0 0.0
    %913 = vmatpush2.msra.mxu0 0.0
    %914 = vmatprep.subr.mxu0 0.0
    %915 = vmatpush2.msra.mxu0 0.0
    %916 = vmatprep.subr.mxu0 0.0
    %917 = vmatpush2.msra.mxu0 0.0
    %918 = vmatprep.subr.mxu0 0.0
    %919 = vmatpush2.msra.mxu0 0.0
    %920 = vmatprep.subr.mxu0 0.0
    %921 = vmatpush2.msra.mxu0 0.0
    %922 = vmatprep.subr.mxu0 0.0
    %923 = vmatpush2.msra.mxu0 0.0
    %924 = vmatprep.subr.mxu0 0.0
    %925 = vmatpush2.msra.mxu0 0.0
    %926 = vmatprep.subr.mxu0 0.0
    %927 = vmatpush2.msra.mxu0 0.0
    %928 = vmatprep.mubr.f32.mxu0 0.0
    %v929 = vand.u32 %v617, 4294901760
    %v930 = vsub.f32 %v617, %v929
    %v931 = vand.u32 %v930, 4294901760
    %932 = vmatmul.mubr.f32.gmra.mxu0 %v931
    %v933 = vpop.f32.mrf.mxu0
    %v934 = vadd.f32 %v858, %v933
    %v935 = vpop.f32.mrf.mxu0
    %936 = vdwg.mxu0
    %937 = vmatprep.subr.mxu0 0.0
    %938 = vmatpush1.msra.mxu0 0.0
    %939 = vmatprep.subr.mxu0 0.0
    %940 = vmatpush1.msra.mxu0 0.0
    %941 = vmatprep.subr.mxu0 0.0
    %942 = vmatpush1.msra.mxu0 0.0
    %943 = vmatprep.subr.mxu0 0.0
    %944 = vmatpush1.msra.mxu0 0.0
    %945 = vmatprep.subr.mxu0 0.0
    %946 = vmatpush1.msra.mxu0 0.0
    %947 = vmatprep.subr.mxu0 0.0
    %948 = vmatpush1.msra.mxu0 0.0
    %949 = vmatprep.subr.mxu0 0.0
    %950 = vmatpush1.msra.mxu0 0.0
    %951 = vmatprep.subr.mxu0 0.0
    %952 = vmatpush1.msra.mxu0 0.0
    %953 = vmatprep.subr.mxu0 0.0
    %954 = vmatpush1.msra.mxu0 0.0
    %955 = vmatprep.subr.mxu0 0.0
    %956 = vmatpush1.msra.mxu0 0.0
    %957 = vmatprep.subr.mxu0 0.0
    %958 = vmatpush1.msra.mxu0 0.0
    %959 = vmatprep.subr.mxu0 0.0
    %960 = vmatpush1.msra.mxu0 0.0
    %961 = vmatprep.subr.mxu0 0.0
    %962 = vmatpush1.msra.mxu0 0.0
    %963 = vmatprep.subr.mxu0 0.0
    %v964 = vand.u32 %v607, 4294901760
    %v965 = vsub.f32 %v607, %v964
    %v966 = vand.u32 %v965, 4294901760
    %967 = vmatpush1.msra.mxu0 %v966
    %968 = vmatprep.subr.mxu0 0.0
    %v969 = vand.u32 %v606, 4294901760
    %v970 = vsub.f32 %v606, %v969
    %v971 = vand.u32 %v970, 4294901760
    %972 = vmatpush1.msra.mxu0 %v971
    %973 = vmatprep.subr.mxu0 0.0
    %v974 = vand.u32 %v605, 4294901760
    %v975 = vsub.f32 %v605, %v974
    %v976 = vand.u32 %v975, 4294901760
    %977 = vmatpush1.msra.mxu0 %v976
    %978 = vmatprep.subr.mxu0 0.0
    %979 = vmatpush2.msra.mxu0 0.0
    %980 = vmatprep.subr.mxu0 0.0
    %981 = vmatpush2.msra.mxu0 0.0
    %982 = vmatprep.subr.mxu0 0.0
    %983 = vmatpush2.msra.mxu0 0.0
    %984 = vmatprep.subr.mxu0 0.0
    %985 = vmatpush2.msra.mxu0 0.0
    %986 = vmatprep.subr.mxu0 0.0
    %987 = vmatpush2.msra.mxu0 0.0
    %988 = vmatprep.subr.mxu0 0.0
    %989 = vmatpush2.msra.mxu0 0.0
    %990 = vmatprep.subr.mxu0 0.0
    %991 = vmatpush2.msra.mxu0 0.0
    %992 = vmatprep.subr.mxu0 0.0
    %993 = vmatpush2.msra.mxu0 0.0
    %994 = vmatprep.subr.mxu0 0.0
    %995 = vmatpush2.msra.mxu0 0.0
    %996 = vmatprep.subr.mxu0 0.0
    %997 = vmatpush2.msra.mxu0 0.0
    %998 = vmatprep.subr.mxu0 0.0
    %999 = vmatpush2.msra.mxu0 0.0
    %1000 = vmatprep.subr.mxu0 0.0
    %1001 = vmatpush2.msra.mxu0 0.0
    %1002 = vmatprep.subr.mxu0 0.0
    %1003 = vmatpush2.msra.mxu0 0.0
    %1004 = vmatprep.subr.mxu0 0.0
    %1005 = vmatpush2.msra.mxu0 0.0
    %1006 = vmatprep.subr.mxu0 0.0
    %1007 = vmatpush2.msra.mxu0 0.0
    %1008 = vmatprep.subr.mxu0 0.0
    %1009 = vmatpush2.msra.mxu0 0.0
    %1010 = vmatprep.mubr.f32.mxu0 0.0
    %v1011 = vand.u32 %v617, 4294901760
    %1012 = vmatmul.mubr.f32.gmra.mxu0 %v1011
    %v1013 = vpop.f32.mrf.mxu0
    %v1014 = vadd.f32 %v934, %v1013
    %v1015 = vpop.f32.mrf.mxu0
    %1016 = vdwg.mxu0
    %1017 = vmatprep.subr.mxu0 0.0
    %1018 = vmatpush1.msra.mxu0 0.0
    %1019 = vmatprep.subr.mxu0 0.0
    %1020 = vmatpush1.msra.mxu0 0.0
    %1021 = vmatprep.subr.mxu0 0.0
    %1022 = vmatpush1.msra.mxu0 0.0
    %1023 = vmatprep.subr.mxu0 0.0
    %1024 = vmatpush1.msra.mxu0 0.0
    %1025 = vmatprep.subr.mxu0 0.0
    %1026 = vmatpush1.msra.mxu0 0.0
    %1027 = vmatprep.subr.mxu0 0.0
    %1028 = vmatpush1.msra.mxu0 0.0
    %1029 = vmatprep.subr.mxu0 0.0
    %1030 = vmatpush1.msra.mxu0 0.0
    %1031 = vmatprep.subr.mxu0 0.0
    %1032 = vmatpush1.msra.mxu0 0.0
    %1033 = vmatprep.subr.mxu0 0.0
    %1034 = vmatpush1.msra.mxu0 0.0
    %1035 = vmatprep.subr.mxu0 0.0
    %1036 = vmatpush1.msra.mxu0 0.0
    %1037 = vmatprep.subr.mxu0 0.0
    %1038 = vmatpush1.msra.mxu0 0.0
    %1039 = vmatprep.subr.mxu0 0.0
    %1040 = vmatpush1.msra.mxu0 0.0
    %1041 = vmatprep.subr.mxu0 0.0
    %1042 = vmatpush1.msra.mxu0 0.0
    %1043 = vmatprep.subr.mxu0 0.0
    %v1044 = vand.u32 %v607, 4294901760
    %1045 = vmatpush1.msra.mxu0 %v1044
    %1046 = vmatprep.subr.mxu0 0.0
    %v1047 = vand.u32 %v606, 4294901760
    %1048 = vmatpush1.msra.mxu0 %v1047
    %1049 = vmatprep.subr.mxu0 0.0
    %v1050 = vand.u32 %v605, 4294901760
    %1051 = vmatpush1.msra.mxu0 %v1050
    %1052 = vmatprep.subr.mxu0 0.0
    %1053 = vmatpush2.msra.mxu0 0.0
    %1054 = vmatprep.subr.mxu0 0.0
    %1055 = vmatpush2.msra.mxu0 0.0
    %1056 = vmatprep.subr.mxu0 0.0
    %1057 = vmatpush2.msra.mxu0 0.0
    %1058 = vmatprep.subr.mxu0 0.0
    %1059 = vmatpush2.msra.mxu0 0.0
    %1060 = vmatprep.subr.mxu0 0.0
    %1061 = vmatpush2.msra.mxu0 0.0
    %1062 = vmatprep.subr.mxu0 0.0
    %1063 = vmatpush2.msra.mxu0 0.0
    %1064 = vmatprep.subr.mxu0 0.0
    %1065 = vmatpush2.msra.mxu0 0.0
    %1066 = vmatprep.subr.mxu0 0.0
    %1067 = vmatpush2.msra.mxu0 0.0
    %1068 = vmatprep.subr.mxu0 0.0
    %1069 = vmatpush2.msra.mxu0 0.0
    %1070 = vmatprep.subr.mxu0 0.0
    %1071 = vmatpush2.msra.mxu0 0.0
    %1072 = vmatprep.subr.mxu0 0.0
    %1073 = vmatpush2.msra.mxu0 0.0
    %1074 = vmatprep.subr.mxu0 0.0
    %1075 = vmatpush2.msra.mxu0 0.0
    %1076 = vmatprep.subr.mxu0 0.0
    %1077 = vmatpush2.msra.mxu0 0.0
    %1078 = vmatprep.subr.mxu0 0.0
    %1079 = vmatpush2.msra.mxu0 0.0
    %1080 = vmatprep.subr.mxu0 0.0
    %1081 = vmatpush2.msra.mxu0 0.0
    %1082 = vmatprep.subr.mxu0 0.0
    %1083 = vmatpush2.msra.mxu0 0.0
    %1084 = vmatprep.mubr.f32.mxu0 0.0
    %v1085 = vand.u32 %v617, 4294901760
    %1086 = vmatmul.mubr.f32.gmra.mxu0 %v1085
    %v1087 = vpop.f32.mrf.mxu0
    %v1088 = vadd.f32 %v1014, %v1087
    %v1089 = vpop.f32.mrf.mxu0
    %1090 = vdwg.mxu0
    %vm1091 = vcmask 1042432
    %v1092 = vsel %vm1091, %v1088, -inf
    %v1093 = vrot.slane %v1092, 4
    %v1094 = vmax.f32 %v1092, %v1093
    %v1095 = vrot.slane %v1094, 2
    %v1096 = vmax.f32 %v1094, %v1095
    %v1097 = vrot.slane %v1096, 1
    %v1098 = vmax.f32 %v1096, %v1097
    %v1099 = vsub.f32 %v1088, %v1098
    %v1100 = vmul.f32 %v1099, 1.442695
    %v1101 = vpow.pop %v1100
    %v1102 = vsel %vm1091, %v1101, 0.0
    %v1103 = vrot.slane %v1102, 4
    %v1104 = vadd.f32 %v1102, %v1103
    %v1105 = vrot.slane %v1104, 2
    %v1106 = vadd.f32 %v1104, %v1105
    %v1107 = vrot.slane %v1106, 1
    %v1108 = vadd.f32 %v1106, %v1107
    %v1109 = vrcp.pop %v1108
    %v1110 = vmul.f32 %v1101, %v1109
    %1111 = vst [vmem:[#allocation7] sm:$0x7] %v1110
    // Predicated region
    $region22: #{policy_network_forward_lane_major.2} parent=1 // pred_check
      _
    $region23: #{policy_network_forward_lane_major.2} parent=1 // pred_check_branch
      %1113 = sbr.rel (0) target = $region25
    $region24: #{policy_network_forward_lane_major.2} parent=1 // pred_region
      %s1115 = ssub.s32 64, 64
      %1116 = vsyncadd [#allocation8], %s1115
      %s1118 = sshll.u32 [#allocation7], 4
      %s1119 = int_to_ptr.vmem [resolvable:$true] %s1118
      %1121 = dma.vmem_to_hbm [thread:$0]  %s1119, 64, %s6, [#allocation8]
    $region25: #{policy_network_forward_lane_major.2} parent=1 // pred_fallthru
      _
    // Predicated region
    $region26: #{policy_network_forward_lane_major.2} parent=1 // pred_check
      _
    $region27: #{policy_network_forward_lane_major.2} parent=1 // pred_check_branch
      %1123 = sbr.rel (0) target = $region29
    $region28: #{policy_network_forward_lane_major.2} parent=1 // pred_region
      %1124 = dma.done [#allocation8], 64
    $region29: #{policy_network_forward_lane_major.2} parent=1 // pred_fallthru
      _
    %1125 = vsyncpa [#allocation8], 1

</llo_original>
